<compile_context>
chip_gen: v7x
topology: tpu7x:2x2x1
jax: 0.10.0
libtpu: 0.0.40
codegen_flags: <defaults>
</compile_context>

<pallas_src>
import jax
import jax.numpy as jnp
from jax.experimental import pallas as pl
from jax.experimental.pallas import tpu as pltpu


def _round_up(x, m):
    return ((x + m - 1) // m) * m


# ----------------------------------------------------------------------------
# Kernel: fused (policy + value) MLP forward for one batch tile.
# ----------------------------------------------------------------------------
def _fused_mlp_kernel(*refs):
    """refs = (x_ref, w0, b0, w1, b1, ..., wL-1, bL-1, out_ref).

    Weights are bf16 (in, out); biases are f32 (1, out); x/out are f32.
    Each layer: bf16 MXU matmul -> f32 accumulate -> f32 bias add -> ReLU.
    """
    x_ref = refs[0]
    out_ref = refs[-1]
    param_refs = refs[1:-1]
    n_layers = len(param_refs) // 2

    h = x_ref[...]                                   # (TILE_B, in) f32
    for i in range(n_layers):
        w = param_refs[2 * i][...]                   # (in, out) bf16
        b = param_refs[2 * i + 1][...]               # (1, out)  f32
        acc = jnp.dot(h.astype(jnp.bfloat16), w,
                      preferred_element_type=jnp.float32)
        h = jnp.maximum(acc + b, 0.0)                # every layer has ReLU
    out_ref[...] = h.astype(out_ref.dtype)


# ----------------------------------------------------------------------------
# Wrapper: one pallas_call for both heads, gridded over batch tiles.
# ----------------------------------------------------------------------------
def fused_mlp_forward(x, fused_params, out_width):
    batch, feat = x.shape

    # Batch tile: multiple of 8 (f32 sublane); cap so VMEM stays comfortable on
    # v7x (64 MiB physical) as well as v5e/v6e.
    tile_b = min(_round_up(max(batch, 1), 8), 256)
    batch_pad = _round_up(batch, tile_b)
    if batch_pad != batch:
        x = jnp.pad(x, ((0, batch_pad - batch), (0, 0)))

    flat_inputs = [x]
    in_specs = [pl.BlockSpec((tile_b, feat), lambda i: (i, 0))]
    param_bytes = 0
    for w, b in fused_params:
        flat_inputs += [w, b]
        # Weights/biases: full-array blocks, index_map -> (0, 0) so they stay
        # VMEM-resident across all batch tiles (loaded once).
        in_specs.append(pl.BlockSpec(w.shape, lambda i: (0, 0)))
        in_specs.append(pl.BlockSpec(b.shape, lambda i: (0, 0)))
        param_bytes += w.size * w.dtype.itemsize + b.size * b.dtype.itemsize

    out_spec = pl.BlockSpec((tile_b, out_width), lambda i: (i, 0))

    # Explicit VMEM budget: params + double-buffered x/out tiles + slack.
    io_bytes = tile_b * feat * 4 + tile_b * out_width * 4
    vmem_limit = int(min(32 * 1024 * 1024,
                         4 * 1024 * 1024 + 4 * (param_bytes + io_bytes)))

    out = pl.pallas_call(
        _fused_mlp_kernel,
        out_shape=jax.ShapeDtypeStruct((batch_pad, out_width), jnp.float32),
        grid=(batch_pad // tile_b,),
        in_specs=in_specs,
        out_specs=out_spec,
        compiler_params=pltpu.CompilerParams(
            dimension_semantics=("parallel",),   # shard batch tiles across TCs (v7x)
            vmem_limit_bytes=vmem_limit),
    )(*flat_inputs)
    return out[:batch]


# ----------------------------------------------------------------------------
# Parameter construction (PyTorch-nn.Linear-style init, weights pre-transposed).
# ----------------------------------------------------------------------------
def _init_linear(key, in_dim, out_dim):
    kw, kb = jax.random.split(key)
    bound = 1.0 / jnp.sqrt(jnp.float32(in_dim))
    w_t = jax.random.uniform(kw, (in_dim, out_dim), jnp.float32, -bound, bound)
    b = jax.random.uniform(kb, (out_dim,), jnp.float32, -bound, bound)
    return w_t, b


def _build_head_params(key, feature_dim, hidden_dim, output_dim, num_hidden_layers):
    dims = [feature_dim] + [hidden_dim] * (num_hidden_layers + 1) + [output_dim]
    keys = jax.random.split(key, len(dims) - 1)
    return [_init_linear(k, dims[i], dims[i + 1]) for i, k in enumerate(keys)]


def _fuse_heads(pi_params, vf_params, out_pad):
    """Fuse the two independent heads into one bf16 matmul chain.

    Layer 0 concatenates columns (both heads read the same x); later layers are
    block-diagonal so the chains stay independent under elementwise ReLU.  The
    final layer is zero-padded to `out_pad` lanes for lane-dense stores.
    """
    fused = []
    n = len(pi_params)
    for idx, ((wp, bp), (wv, bv)) in enumerate(zip(pi_params, vf_params)):
        if idx == 0:
            w = jnp.concatenate([wp, wv], axis=1)
        else:
            top = jnp.concatenate(
                [wp, jnp.zeros((wp.shape[0], wv.shape[1]), wp.dtype)], axis=1)
            bot = jnp.concatenate(
                [jnp.zeros((wv.shape[0], wp.shape[1]), wv.dtype), wv], axis=1)
            w = jnp.concatenate([top, bot], axis=0)
        b = jnp.concatenate([bp, bv], axis=0)
        if idx == n - 1 and out_pad > b.shape[0]:
            pad = out_pad - b.shape[0]
            w = jnp.pad(w, ((0, 0), (0, pad)))
            b = jnp.pad(b, (0, pad))
        # Hoisted dtype/shape plumbing: bf16 weights, f32 (1, out) biases.
        fused.append((w.astype(jnp.bfloat16),
                      b.reshape(1, -1).astype(jnp.float32)))
    return fused


class CustomNetworkPallas:
    """JAX/Pallas port of CustomNetwork: policy + value MLPs in one fused kernel."""

    def __init__(self, feature_dim, hidden_dim=128, num_hidden_layers=2,
                 output_dim_pi=64, output_dim_vf=64, key=None):
        if key is None:
            key = jax.random.PRNGKey(0)
        k_pi, k_vf = jax.random.split(key)
        self.latent_dim_pi = output_dim_pi
        self.latent_dim_vf = output_dim_vf
        # Keep f32 per-head params for reference checking.
        self.policy_params = _build_head_params(
            k_pi, feature_dim, hidden_dim, output_dim_pi, num_hidden_layers)
        self.value_params = _build_head_params(
            k_vf, feature_dim, hidden_dim, output_dim_vf, num_hidden_layers)
        # Fused bf16 chain used by the kernel; output padded to a multiple of 128.
        self._out_pad = _round_up(output_dim_pi + output_dim_vf, 128)
        self.fused_params = _fuse_heads(self.policy_params, self.value_params,
                                        self._out_pad)

    def forward(self, features):
        out = fused_mlp_forward(features, self.fused_params, self._out_pad)
        pi = out[:, :self.latent_dim_pi]
        vf = out[:, self.latent_dim_pi:self.latent_dim_pi + self.latent_dim_vf]
        return pi, vf

    def forward_actor(self, features):
        return self.forward(features)[0]

    def forward_critic(self, features):
        return self.forward(features)[1]


def _reference_mlp(x, params):
    h = x
    for w_t, b in params:
        h = jnp.maximum(h @ w_t + b, 0.0)   # note: ReLU after final layer too (matches spec)
    return h


if __name__ == "__main__":
    key = jax.random.PRNGKey(0)
    k_net, k_x = jax.random.split(key)

    batch, feature_dim, hidden_dim = 8, 32, 128
    net = CustomNetworkPallas(feature_dim=feature_dim, hidden_dim=hidden_dim,
                              num_hidden_layers=2, output_dim_pi=64,
                              output_dim_vf=64, key=k_net)

    x = jax.random.normal(k_x, (batch, feature_dim), jnp.float32)

    latent_pi, latent_vf = net.forward(x)
    latent_pi = jax.block_until_ready(latent_pi)
    latent_vf = jax.block_until_ready(latent_vf)

    # Sanity-check against the plain-JAX f32 reference (kernel uses bf16 weights
    # with f32 accumulation, so compare with a loose tolerance).
    ref_pi = _reference_mlp(x, net.policy_params)
    ref_vf = _reference_mlp(x, net.value_params)
    assert latent_pi.shape == (batch, 64) and latent_vf.shape == (batch, 64)
    assert jnp.allclose(latent_pi, ref_pi, atol=5e-2, rtol=5e-2)
    assert jnp.allclose(latent_vf, ref_vf, atol=5e-2, rtol=5e-2)

    print("KERNEL_OK")
</pallas_src>

<mosaic_0001>
module attributes {stable_mosaic.version = 11 : i64} {
  func.func @_fused_mlp_kernel(%arg0: i32, %arg1: memref<8x32xf32, #tpu.memory_space<vmem>>, %arg2: memref<32x256xbf16, #tpu.memory_space<vmem>>, %arg3: memref<1x256xf32, #tpu.memory_space<vmem>>, %arg4: memref<256x256xbf16, #tpu.memory_space<vmem>>, %arg5: memref<1x256xf32, #tpu.memory_space<vmem>>, %arg6: memref<256x256xbf16, #tpu.memory_space<vmem>>, %arg7: memref<1x256xf32, #tpu.memory_space<vmem>>, %arg8: memref<256x128xbf16, #tpu.memory_space<vmem>>, %arg9: memref<1x128xf32, #tpu.memory_space<vmem>>, %arg10: memref<8x128xf32, #tpu.memory_space<vmem>>) attributes {dimension_semantics = [#tpu.dimension_semantics<parallel>], iteration_bounds = array<i64: 1>, scalar_prefetch = 0 : i64, scratch_operands = 0 : i64, tpu.core_type = #tpu.core_type<tc>, window_params = [{transform_indices = @transform_0, window_bounds = array<i64: 8, 32>}, {pipeline_mode = #tpu.pipeline_mode<synchronous>, transform_indices = @transform_1, window_bounds = array<i64: 32, 256>}, {pipeline_mode = #tpu.pipeline_mode<synchronous>, transform_indices = @transform_2, window_bounds = array<i64: 1, 256>}, {pipeline_mode = #tpu.pipeline_mode<synchronous>, transform_indices = @transform_3, window_bounds = array<i64: 256, 256>}, {pipeline_mode = #tpu.pipeline_mode<synchronous>, transform_indices = @transform_4, window_bounds = array<i64: 1, 256>}, {pipeline_mode = #tpu.pipeline_mode<synchronous>, transform_indices = @transform_5, window_bounds = array<i64: 256, 256>}, {pipeline_mode = #tpu.pipeline_mode<synchronous>, transform_indices = @transform_6, window_bounds = array<i64: 1, 256>}, {pipeline_mode = #tpu.pipeline_mode<synchronous>, transform_indices = @transform_7, window_bounds = array<i64: 256, 128>}, {pipeline_mode = #tpu.pipeline_mode<synchronous>, transform_indices = @transform_8, window_bounds = array<i64: 1, 128>}, {transform_indices = @transform_9, window_bounds = array<i64: 8, 128>}]} {
    %c0 = arith.constant 0 : index
    %c0_0 = arith.constant 0 : index
    %0 = vector.load %arg1[%c0, %c0_0] : memref<8x32xf32, #tpu.memory_space<vmem>>, vector<8x32xf32>
    %c0_1 = arith.constant 0 : index
    %c0_2 = arith.constant 0 : index
    %1 = vector.load %arg2[%c0_1, %c0_2] : memref<32x256xbf16, #tpu.memory_space<vmem>>, vector<32x256xbf16>
    %c0_3 = arith.constant 0 : index
    %c0_4 = arith.constant 0 : index
    %2 = vector.load %arg3[%c0_3, %c0_4] : memref<1x256xf32, #tpu.memory_space<vmem>>, vector<1x256xf32>
    %3 = arith.truncf %0 : vector<8x32xf32> to vector<8x32xbf16>
    %cst = arith.constant dense<0.000000e+00> : vector<8x256xf32>
    %4 = tpu.matmul %3, %1, %cst {dimension_numbers = #tpu.dot_dimension_numbers<[1], [0], [0], [1], [0, 0, 1, 1], [], []>} : vector<8x32xbf16>, vector<32x256xbf16>, vector<8x256xf32> -> vector<8x256xf32>
    %5 = vector.broadcast %2 : vector<1x256xf32> to vector<8x256xf32>
    %6 = arith.addf %4, %5 : vector<8x256xf32>
    %cst_5 = arith.constant 0.000000e+00 : f32
    %7 = vector.broadcast %cst_5 : f32 to vector<8x256xf32>
    %8 = arith.maximumf %6, %7 : vector<8x256xf32>
    %c0_6 = arith.constant 0 : index
    %c0_7 = arith.constant 0 : index
    %9 = vector.load %arg4[%c0_6, %c0_7] : memref<256x256xbf16, #tpu.memory_space<vmem>>, vector<256x256xbf16>
    %c0_8 = arith.constant 0 : index
    %c0_9 = arith.constant 0 : index
    %10 = vector.load %arg5[%c0_8, %c0_9] : memref<1x256xf32, #tpu.memory_space<vmem>>, vector<1x256xf32>
    %11 = arith.truncf %8 : vector<8x256xf32> to vector<8x256xbf16>
    %cst_10 = arith.constant dense<0.000000e+00> : vector<8x256xf32>
    %12 = tpu.matmul %11, %9, %cst_10 {dimension_numbers = #tpu.dot_dimension_numbers<[1], [0], [0], [1], [0, 0, 1, 1], [], []>} : vector<8x256xbf16>, vector<256x256xbf16>, vector<8x256xf32> -> vector<8x256xf32>
    %13 = vector.broadcast %10 : vector<1x256xf32> to vector<8x256xf32>
    %14 = arith.addf %12, %13 : vector<8x256xf32>
    %cst_11 = arith.constant 0.000000e+00 : f32
    %15 = vector.broadcast %cst_11 : f32 to vector<8x256xf32>
    %16 = arith.maximumf %14, %15 : vector<8x256xf32>
    %c0_12 = arith.constant 0 : index
    %c0_13 = arith.constant 0 : index
    %17 = vector.load %arg6[%c0_12, %c0_13] : memref<256x256xbf16, #tpu.memory_space<vmem>>, vector<256x256xbf16>
    %c0_14 = arith.constant 0 : index
    %c0_15 = arith.constant 0 : index
    %18 = vector.load %arg7[%c0_14, %c0_15] : memref<1x256xf32, #tpu.memory_space<vmem>>, vector<1x256xf32>
    %19 = arith.truncf %16 : vector<8x256xf32> to vector<8x256xbf16>
    %cst_16 = arith.constant dense<0.000000e+00> : vector<8x256xf32>
    %20 = tpu.matmul %19, %17, %cst_16 {dimension_numbers = #tpu.dot_dimension_numbers<[1], [0], [0], [1], [0, 0, 1, 1], [], []>} : vector<8x256xbf16>, vector<256x256xbf16>, vector<8x256xf32> -> vector<8x256xf32>
    %21 = vector.broadcast %18 : vector<1x256xf32> to vector<8x256xf32>
    %22 = arith.addf %20, %21 : vector<8x256xf32>
    %cst_17 = arith.constant 0.000000e+00 : f32
    %23 = vector.broadcast %cst_17 : f32 to vector<8x256xf32>
    %24 = arith.maximumf %22, %23 : vector<8x256xf32>
    %c0_18 = arith.constant 0 : index
    %c0_19 = arith.constant 0 : index
    %25 = vector.load %arg8[%c0_18, %c0_19] : memref<256x128xbf16, #tpu.memory_space<vmem>>, vector<256x128xbf16>
    %c0_20 = arith.constant 0 : index
    %c0_21 = arith.constant 0 : index
    %26 = vector.load %arg9[%c0_20, %c0_21] : memref<1x128xf32, #tpu.memory_space<vmem>>, vector<1x128xf32>
    %27 = arith.truncf %24 : vector<8x256xf32> to vector<8x256xbf16>
    %cst_22 = arith.constant dense<0.000000e+00> : vector<8x128xf32>
    %28 = tpu.matmul %27, %25, %cst_22 {dimension_numbers = #tpu.dot_dimension_numbers<[1], [0], [0], [1], [0, 0, 1, 1], [], []>} : vector<8x256xbf16>, vector<256x128xbf16>, vector<8x128xf32> -> vector<8x128xf32>
    %29 = vector.broadcast %26 : vector<1x128xf32> to vector<8x128xf32>
    %30 = arith.addf %28, %29 : vector<8x128xf32>
    %cst_23 = arith.constant 0.000000e+00 : f32
    %31 = vector.broadcast %cst_23 : f32 to vector<8x128xf32>
    %32 = arith.maximumf %30, %31 : vector<8x128xf32>
    %c0_24 = arith.constant 0 : index
    %c0_25 = arith.constant 0 : index
    %33 = vector.load %arg10[%c0_24, %c0_25] : memref<8x128xf32, #tpu.memory_space<vmem>>, vector<8x128xf32>
    tpu.vector_store %arg10[%c0_24, %c0_25], %32 {strides = array<i32>} : memref<8x128xf32, #tpu.memory_space<vmem>>, vector<8x128xf32>,
    return
  }
  func.func @transform_0(%arg0: i32) -> (i32, i32) {
    %c0_i32 = arith.constant 0 : i32
    %c0_i32_0 = arith.constant 0 : i32
    return %arg0, %c0_i32 : i32, i32
  }
  func.func @transform_1(%arg0: i32) -> (i32, i32) {
    %c0_i32 = arith.constant 0 : i32
    %c0_i32_0 = arith.constant 0 : i32
    %c0_i32_1 = arith.constant 0 : i32
    return %c0_i32, %c0_i32_0 : i32, i32
  }
  func.func @transform_2(%arg0: i32) -> (i32, i32) {
    %c0_i32 = arith.constant 0 : i32
    %c0_i32_0 = arith.constant 0 : i32
    %c0_i32_1 = arith.constant 0 : i32
    return %c0_i32, %c0_i32_0 : i32, i32
  }
  func.func @transform_3(%arg0: i32) -> (i32, i32) {
    %c0_i32 = arith.constant 0 : i32
    %c0_i32_0 = arith.constant 0 : i32
    %c0_i32_1 = arith.constant 0 : i32
    return %c0_i32, %c0_i32_0 : i32, i32
  }
  func.func @transform_4(%arg0: i32) -> (i32, i32) {
    %c0_i32 = arith.constant 0 : i32
    %c0_i32_0 = arith.constant 0 : i32
    %c0_i32_1 = arith.constant 0 : i32
    return %c0_i32, %c0_i32_0 : i32, i32
  }
  func.func @transform_5(%arg0: i32) -> (i32, i32) {
    %c0_i32 = arith.constant 0 : i32
    %c0_i32_0 = arith.constant 0 : i32
    %c0_i32_1 = arith.constant 0 : i32
    return %c0_i32, %c0_i32_0 : i32, i32
  }
  func.func @transform_6(%arg0: i32) -> (i32, i32) {
    %c0_i32 = arith.constant 0 : i32
    %c0_i32_0 = arith.constant 0 : i32
    %c0_i32_1 = arith.constant 0 : i32
    return %c0_i32, %c0_i32_0 : i32, i32
  }
  func.func @transform_7(%arg0: i32) -> (i32, i32) {
    %c0_i32 = arith.constant 0 : i32
    %c0_i32_0 = arith.constant 0 : i32
    %c0_i32_1 = arith.constant 0 : i32
    return %c0_i32, %c0_i32_0 : i32, i32
  }
  func.func @transform_8(%arg0: i32) -> (i32, i32) {
    %c0_i32 = arith.constant 0 : i32
    %c0_i32_0 = arith.constant 0 : i32
    %c0_i32_1 = arith.constant 0 : i32
    return %c0_i32, %c0_i32_0 : i32, i32
  }
  func.func @transform_9(%arg0: i32) -> (i32, i32) {
    %c0_i32 = arith.constant 0 : i32
    %c0_i32_0 = arith.constant 0 : i32
    return %arg0, %c0_i32 : i32, i32
  }
}

</mosaic_0001>

<llo_original>
// kernel: tpu_custom_call.1
$region0: #{tpu_custom_call.1}
  #allocation0 [shape = 'u32[]', space=smem, size = 0x4, offset = 0x4, fixed_abs, tag = 'smem constant byte address 0x4 - core index']
  #allocation1 [shape = 'u32[144,128]{1,0:T(1,128)}', space=vmem, size = 0x12000, scoped, tag = 'internal scratch']
  %s0 = inlined_call_operand.hbm [shape: f32[8,32], index: 0, kind: input, shape index: {}]
  %s1 = inlined_call_operand.hbm [shape: bf16[32,256], index: 1, kind: input, shape index: {}]
  %s2 = inlined_call_operand.vmem [shape: f32[1,256], index: 2, kind: input, shape index: {}]
  %s3 = inlined_call_operand.hbm [shape: bf16[256,256], index: 3, kind: input, shape index: {}]
  %s4 = inlined_call_operand.vmem [shape: f32[1,256], index: 4, kind: input, shape index: {}]
  %s5 = inlined_call_operand.hbm [shape: bf16[256,256], index: 5, kind: input, shape index: {}]
  %s6 = inlined_call_operand.vmem [shape: f32[1,256], index: 6, kind: input, shape index: {}]
  %s7 = inlined_call_operand.hbm [shape: bf16[256,128], index: 7, kind: input, shape index: {}]
  %s8 = inlined_call_operand.vmem [shape: f32[1,128], index: 8, kind: input, shape index: {}]
  %s9 = inlined_call_operand.hbm [shape: f32[8,128], index: 9, kind: output, shape index: {}]
  %s10 = sld [smem:[#allocation0]]
  $region66: #{tpu_custom_call.1} parent=0
    _
  %s12 = ssub.s32 1, %s10
  %s13 = scalar_select 0, %s12, %s10
  $region1: #{tpu_custom_call.1} parent=0
    #allocation2 [shape = 'u8[4096]{0}', space=vmem, size = 0x1000, scoped, tag = 'input window, operand 0, single buffered']
    #allocation3 [shape = 's32[1]{0}', space=sflag, size = 0x4, scoped, tag = 'scoped memory for tpu_custom_call.1']
    #allocation4 [shape = 's32[1]{0}', space=sflag, size = 0x4, scoped, tag = 'scoped memory for tpu_custom_call.1']
    #allocation5 [shape = 'u8[16384]{0}', space=vmem, size = 0x4000, scoped, tag = 'input window, operand 1, single buffered']
    #allocation6 [shape = 's32[1]{0}', space=sflag, size = 0x4, scoped, tag = 'scoped memory for tpu_custom_call.1']
    #allocation7 [shape = 'u8[131072]{0}', space=vmem, size = 0x20000, scoped, tag = 'input window, operand 3, single buffered']
    #allocation8 [shape = 'u8[131072]{0}', space=vmem, size = 0x20000, scoped, tag = 'input window, operand 5, single buffered']
    #allocation9 [shape = 's32[1]{0}', space=sflag, size = 0x4, scoped, tag = 'scoped memory for tpu_custom_call.1']
    #allocation10 [shape = 'u8[65536]{0}', space=vmem, size = 0x10000, scoped, tag = 'input window, operand 7, single buffered']
    #allocation11 [shape = 'u8[4096]{0}', space=vmem, size = 0x1000, scoped, tag = 'output window, operand 0, single buffered']
    %14 = vsyncpa [#allocation3], 0
    %15 = vsyncpa [#allocation6], 0
    %16 = vsyncpa [#allocation9], 0
    %17 = vsyncpa [#allocation4], 0
    // Predicated region
    $region2: #{tpu_custom_call.1} parent=1 // pred_check
      _
    $region3: #{tpu_custom_call.1} parent=1 // pred_check_branch
      %19 = sbr.rel (0) target = $region5
    $region4: #{tpu_custom_call.1} parent=1 // pred_region
      %s21 = ssub.s32 128, 128
      %22 = vsyncadd [#allocation3], %s21
      %s24 = sshll.u32 [#allocation2], 4
      %s25 = int_to_ptr.vmem [resolvable:$true] %s24
      %27 = dma.hbm_to_vmem [thread:$0]  %s0, 128, %s25, [#allocation3]
    $region5: #{tpu_custom_call.1} parent=1 // pred_fallthru
      _
    // Predicated region
    $region6: #{tpu_custom_call.1} parent=1 // pred_check
      _
    $region7: #{tpu_custom_call.1} parent=1 // pred_check_branch
      %29 = sbr.rel (0) target = $region9
    $region8: #{tpu_custom_call.1} parent=1 // pred_region
      %s31 = ssub.s32 512, 512
      %32 = vsyncadd [#allocation6], %s31
      %s33 = sshll.u32 [#allocation5], 4
      %s34 = int_to_ptr.vmem [resolvable:$true] %s33
      %39 = dma.hbm_to_vmem [thread:$0]  %s1, 512, %s34, [#allocation6], 128, 128, 8
    $region9: #{tpu_custom_call.1} parent=1 // pred_fallthru
      _
    // Predicated region
    $region10: #{tpu_custom_call.1} parent=1 // pred_check
      _
    $region11: #{tpu_custom_call.1} parent=1 // pred_check_branch
      %41 = sbr.rel (0) target = $region13
    $region12: #{tpu_custom_call.1} parent=1 // pred_region
      _
    $region13: #{tpu_custom_call.1} parent=1 // pred_fallthru
      _
    // Predicated region
    $region14: #{tpu_custom_call.1} parent=1 // pred_check
      _
    $region15: #{tpu_custom_call.1} parent=1 // pred_check_branch
      %43 = sbr.rel (0) target = $region17
    $region16: #{tpu_custom_call.1} parent=1 // pred_region
      %s45 = ssub.s32 4096, 4096
      %46 = vsyncadd [#allocation6], %s45
      %s47 = sshll.u32 [#allocation7], 4
      %s48 = int_to_ptr.vmem [resolvable:$true] %s47
      %53 = dma.hbm_to_vmem [thread:$0]  %s3, 4096, %s48, [#allocation6], 128, 128, 8
    $region17: #{tpu_custom_call.1} parent=1 // pred_fallthru
      _
    // Predicated region
    $region18: #{tpu_custom_call.1} parent=1 // pred_check
      _
    $region19: #{tpu_custom_call.1} parent=1 // pred_check_branch
      %55 = sbr.rel (0) target = $region21
    $region20: #{tpu_custom_call.1} parent=1 // pred_region
      _
    $region21: #{tpu_custom_call.1} parent=1 // pred_fallthru
      _
    // Predicated region
    $region22: #{tpu_custom_call.1} parent=1 // pred_check
      _
    $region23: #{tpu_custom_call.1} parent=1 // pred_check_branch
      %57 = sbr.rel (0) target = $region25
    $region24: #{tpu_custom_call.1} parent=1 // pred_region
      %s59 = ssub.s32 4096, 4096
      %60 = vsyncadd [#allocation9], %s59
      %s61 = sshll.u32 [#allocation8], 4
      %s62 = int_to_ptr.vmem [resolvable:$true] %s61
      %67 = dma.hbm_to_vmem [thread:$0]  %s5, 4096, %s62, [#allocation9], 128, 128, 8
    $region25: #{tpu_custom_call.1} parent=1 // pred_fallthru
      _
    // Predicated region
    $region26: #{tpu_custom_call.1} parent=1 // pred_check
      _
    $region27: #{tpu_custom_call.1} parent=1 // pred_check_branch
      %69 = sbr.rel (0) target = $region29
    $region28: #{tpu_custom_call.1} parent=1 // pred_region
      _
    $region29: #{tpu_custom_call.1} parent=1 // pred_fallthru
      _
    // Predicated region
    $region30: #{tpu_custom_call.1} parent=1 // pred_check
      _
    $region31: #{tpu_custom_call.1} parent=1 // pred_check_branch
      %71 = sbr.rel (0) target = $region33
    $region32: #{tpu_custom_call.1} parent=1 // pred_region
      %s73 = ssub.s32 2048, 2048
      %74 = vsyncadd [#allocation9], %s73
      %s75 = sshll.u32 [#allocation10], 4
      %s76 = int_to_ptr.vmem [resolvable:$true] %s75
      %81 = dma.hbm_to_vmem [thread:$0]  %s7, 2048, %s76, [#allocation9], 64, 64, 4
    $region33: #{tpu_custom_call.1} parent=1 // pred_fallthru
      _
    // Predicated region
    $region34: #{tpu_custom_call.1} parent=1 // pred_check
      _
    $region35: #{tpu_custom_call.1} parent=1 // pred_check_branch
      %83 = sbr.rel (0) target = $region37
    $region36: #{tpu_custom_call.1} parent=1 // pred_region
      _
    $region37: #{tpu_custom_call.1} parent=1 // pred_fallthru
      _
    // Predicated region
    $region38: #{tpu_custom_call.1} parent=1 // pred_check
      _
    $region39: #{tpu_custom_call.1} parent=1 // pred_check_branch
      %85 = sbr.rel (0) target = $region41
    $region40: #{tpu_custom_call.1} parent=1 // pred_region
      %86 = dma.done [#allocation3], 128
    $region41: #{tpu_custom_call.1} parent=1 // pred_fallthru
      _
    // Predicated region
    $region42: #{tpu_custom_call.1} parent=1 // pred_check
      _
    $region43: #{tpu_custom_call.1} parent=1 // pred_check_branch
      %88 = sbr.rel (0) target = $region45
    $region44: #{tpu_custom_call.1} parent=1 // pred_region
      %89 = dma.done [#allocation6], 512
    $region45: #{tpu_custom_call.1} parent=1 // pred_fallthru
      _
    // Predicated region
    $region46: #{tpu_custom_call.1} parent=1 // pred_check
      _
    $region47: #{tpu_custom_call.1} parent=1 // pred_check_branch
      %91 = sbr.rel (0) target = $region49
    $region48: #{tpu_custom_call.1} parent=1 // pred_region
      %92 = dma.done [#allocation6], 4096
    $region49: #{tpu_custom_call.1} parent=1 // pred_fallthru
      _
    // Predicated region
    $region50: #{tpu_custom_call.1} parent=1 // pred_check
      _
    $region51: #{tpu_custom_call.1} parent=1 // pred_check_branch
      %94 = sbr.rel (0) target = $region53
    $region52: #{tpu_custom_call.1} parent=1 // pred_region
      %95 = dma.done [#allocation9], 4096
    $region53: #{tpu_custom_call.1} parent=1 // pred_fallthru
      _
    // Predicated region
    $region54: #{tpu_custom_call.1} parent=1 // pred_check
      _
    $region55: #{tpu_custom_call.1} parent=1 // pred_check_branch
      %97 = sbr.rel (0) target = $region57
    $region56: #{tpu_custom_call.1} parent=1 // pred_region
      %98 = dma.done [#allocation9], 2048
    $region57: #{tpu_custom_call.1} parent=1 // pred_fallthru
      _
    %v100 = vld [vmem:[#allocation2] sm:$0xff]
    %v101 = vld [vmem:[#allocation5] sm:$0xff]
    %v102 = vld [vmem:[#allocation5 + $0x8] sm:$0xff]
    %v103 = vld [vmem:[#allocation5 + $0x10] sm:$0xff]
    %v104 = vld [vmem:[#allocation5 + $0x18] sm:$0xff]
    %v105 = vld [vmem:[%s2] sm:$0x3]
    %v106 = vpack.c.bf16 %v100, %v100
    %v108 = vlaneseq
    %v109 = vshrl.u32 %v108, 7
    %v110 = vsub.s32 0, %v109
    %v111 = vrot.slane %v105, %v110
    %v112 = vlaneseq
    %v113 = vshrl.u32 %v112, 7
    %v114 = vsub.s32 1, %v113
    %v115 = vrot.slane %v105, %v114
    %v122 = vunpack.c.l.b16 %v101
    %v123 = vunpack.c.h.b16 %v101
    %v124 = vunpack.c.l.b16 %v102
    %v125 = vunpack.c.h.b16 %v102
    %v126 = vunpack.c.l.b16 %v103
    %v127 = vunpack.c.h.b16 %v103
    %v128 = vunpack.c.l.b16 %v104
    %v129 = vunpack.c.h.b16 %v104
    %v130 = vpack.c.b16 %v124, %v122
    %v131 = vpack.c.b16 %v125, %v123
    %v132 = vpack.c.b16 %v128, %v126
    %v133 = vpack.c.b16 %v129, %v127
    %vm138 = vcmask 261120
    %v140 = vsel %vm138, %v106, 0
    %142 = vmatprep.subr.bf16.mxu0 %v131
    %143 = vmatpush1.bf16.msra.mxu0 %v130
    %144 = vmatprep.subr.bf16.mxu0 %v133
    %145 = vmatpush1.bf16.msra.mxu0 %v132
    %146 = vmatprep.subr.bf16.mxu0 0
    %147 = vmatpush1.bf16.msra.mxu0 0
    %148 = vmatprep.subr.bf16.mxu0 0
    %149 = vmatpush1.bf16.msra.mxu0 0
    %150 = vmatprep.subr.bf16.mxu0 0
    %151 = vmatpush1.bf16.msra.mxu0 0
    %152 = vmatprep.subr.bf16.mxu0 0
    %153 = vmatpush1.bf16.msra.mxu0 0
    %154 = vmatprep.subr.bf16.mxu0 0
    %155 = vmatpush1.bf16.msra.mxu0 0
    %156 = vmatprep.subr.bf16.mxu0 0
    %157 = vmatpush1.bf16.msra.mxu0 0
    %158 = vmatprep.subr.bf16.mxu0 0
    %159 = vmatpush1.bf16.msra.mxu0 0
    %160 = vmatprep.subr.bf16.mxu0 0
    %161 = vmatpush1.bf16.msra.mxu0 0
    %162 = vmatprep.subr.bf16.mxu0 0
    %163 = vmatpush1.bf16.msra.mxu0 0
    %164 = vmatprep.subr.bf16.mxu0 0
    %165 = vmatpush1.bf16.msra.mxu0 0
    %166 = vmatprep.subr.bf16.mxu0 0
    %167 = vmatpush1.bf16.msra.mxu0 0
    %168 = vmatprep.subr.bf16.mxu0 0
    %169 = vmatpush1.bf16.msra.mxu0 0
    %170 = vmatprep.subr.bf16.mxu0 0
    %171 = vmatpush1.bf16.msra.mxu0 0
    %172 = vmatprep.subr.bf16.mxu0 0
    %173 = vmatpush1.bf16.msra.mxu0 0
    %174 = vmatprep.mubr.bf16.mxu0 0
    %175 = vmatmul.mubr.bf16.gmra.mrb[0].mxu0 %v140
    %v176 = vpop.f32.mrb[0].mxu0
    %v177 = vadd.f32 %v111, %v176
    %v178 = vpop.f32.mrb[0].mxu0
    %v179 = vadd.f32 %v115, %v178
    %v180 = vpop.f32.mrb[0].mxu0
    %v181 = vpop.f32.mrb[0].mxu0
    %182 = vdwg.mxu0
    %v183 = vmax.f32 %v177, 0.0
    %v184 = vmax.f32 %v179, 0.0
    %v185 = vld [vmem:[#allocation7] sm:$0xff]
    %v186 = vld [vmem:[#allocation7 + $0x8] sm:$0xff]
    %v187 = vld [vmem:[#allocation7 + $0x10] sm:$0xff]
    %v188 = vld [vmem:[#allocation7 + $0x18] sm:$0xff]
    %v189 = vld [vmem:[#allocation7 + $0x20] sm:$0xff]
    %v190 = vld [vmem:[#allocation7 + $0x28] sm:$0xff]
    %v191 = vld [vmem:[#allocation7 + $0x30] sm:$0xff]
    %v192 = vld [vmem:[#allocation7 + $0x38] sm:$0xff]
    %v193 = vld [vmem:[#allocation7 + $0x40] sm:$0xff]
    %v194 = vld [vmem:[#allocation7 + $0x48] sm:$0xff]
    %v195 = vld [vmem:[#allocation7 + $0x50] sm:$0xff]
    %v196 = vld [vmem:[#allocation7 + $0x58] sm:$0xff]
    %v197 = vld [vmem:[#allocation7 + $0x60] sm:$0xff]
    %v198 = vld [vmem:[#allocation7 + $0x68] sm:$0xff]
    %v199 = vld [vmem:[#allocation7 + $0x70] sm:$0xff]
    %v200 = vld [vmem:[#allocation7 + $0x78] sm:$0xff]
    %v201 = vld [vmem:[#allocation7 + $0x80] sm:$0xff]
    %v202 = vld [vmem:[#allocation7 + $0x88] sm:$0xff]
    %v203 = vld [vmem:[#allocation7 + $0x90] sm:$0xff]
    %v204 = vld [vmem:[#allocation7 + $0x98] sm:$0xff]
    %v205 = vld [vmem:[#allocation7 + $0xa0] sm:$0xff]
    %v206 = vld [vmem:[#allocation7 + $0xa8] sm:$0xff]
    %v207 = vld [vmem:[#allocation7 + $0xb0] sm:$0xff]
    %v208 = vld [vmem:[#allocation7 + $0xb8] sm:$0xff]
    %v209 = vld [vmem:[#allocation7 + $0xc0] sm:$0xff]
    %v210 = vld [vmem:[#allocation7 + $0xc8] sm:$0xff]
    %v211 = vld [vmem:[#allocation7 + $0xd0] sm:$0xff]
    %v212 = vld [vmem:[#allocation7 + $0xd8] sm:$0xff]
    %v213 = vld [vmem:[#allocation7 + $0xe0] sm:$0xff]
    %v214 = vld [vmem:[#allocation7 + $0xe8] sm:$0xff]
    %v215 = vld [vmem:[#allocation7 + $0xf0] sm:$0xff]
    %v216 = vld [vmem:[#allocation7 + $0xf8] sm:$0xff]
    %v217 = vld [vmem:[%s4] sm:$0x3]
    %v218 = vpack.c.bf16 %v183, %v183
    %v219 = vpack.c.bf16 %v184, %v184
    %v221 = vlaneseq
    %v222 = vshrl.u32 %v221, 7
    %v223 = vsub.s32 0, %v222
    %v224 = vrot.slane %v217, %v223
    %v225 = vlaneseq
    %v226 = vshrl.u32 %v225, 7
    %v227 = vsub.s32 1, %v226
    %v228 = vrot.slane %v217, %v227
    %v263 = vunpack.c.l.b16 %v185
    %v264 = vunpack.c.h.b16 %v185
    %v265 = vunpack.c.l.b16 %v186
    %v266 = vunpack.c.h.b16 %v186
    %v267 = vunpack.c.l.b16 %v187
    %v268 = vunpack.c.h.b16 %v187
    %v269 = vunpack.c.l.b16 %v188
    %v270 = vunpack.c.h.b16 %v188
    %v271 = vunpack.c.l.b16 %v189
    %v272 = vunpack.c.h.b16 %v189
    %v273 = vunpack.c.l.b16 %v190
    %v274 = vunpack.c.h.b16 %v190
    %v275 = vunpack.c.l.b16 %v191
    %v276 = vunpack.c.h.b16 %v191
    %v277 = vunpack.c.l.b16 %v192
    %v278 = vunpack.c.h.b16 %v192
    %v279 = vunpack.c.l.b16 %v193
    %v280 = vunpack.c.h.b16 %v193
    %v281 = vunpack.c.l.b16 %v194
    %v282 = vunpack.c.h.b16 %v194
    %v283 = vunpack.c.l.b16 %v195
    %v284 = vunpack.c.h.b16 %v195
    %v285 = vunpack.c.l.b16 %v196
    %v286 = vunpack.c.h.b16 %v196
    %v287 = vunpack.c.l.b16 %v197
    %v288 = vunpack.c.h.b16 %v197
    %v289 = vunpack.c.l.b16 %v198
    %v290 = vunpack.c.h.b16 %v198
    %v291 = vunpack.c.l.b16 %v199
    %v292 = vunpack.c.h.b16 %v199
    %v293 = vunpack.c.l.b16 %v200
    %v294 = vunpack.c.h.b16 %v200
    %v295 = vunpack.c.l.b16 %v201
    %v296 = vunpack.c.h.b16 %v201
    %v297 = vunpack.c.l.b16 %v202
    %v298 = vunpack.c.h.b16 %v202
    %v299 = vunpack.c.l.b16 %v203
    %v300 = vunpack.c.h.b16 %v203
    %v301 = vunpack.c.l.b16 %v204
    %v302 = vunpack.c.h.b16 %v204
    %v303 = vunpack.c.l.b16 %v205
    %v304 = vunpack.c.h.b16 %v205
    %v305 = vunpack.c.l.b16 %v206
    %v306 = vunpack.c.h.b16 %v206
    %v307 = vunpack.c.l.b16 %v207
    %v308 = vunpack.c.h.b16 %v207
    %v309 = vunpack.c.l.b16 %v208
    %v310 = vunpack.c.h.b16 %v208
    %v311 = vunpack.c.l.b16 %v209
    %v312 = vunpack.c.h.b16 %v209
    %v313 = vunpack.c.l.b16 %v210
    %v314 = vunpack.c.h.b16 %v210
    %v315 = vunpack.c.l.b16 %v211
    %v316 = vunpack.c.h.b16 %v211
    %v317 = vunpack.c.l.b16 %v212
    %v318 = vunpack.c.h.b16 %v212
    %v319 = vunpack.c.l.b16 %v213
    %v320 = vunpack.c.h.b16 %v213
    %v321 = vunpack.c.l.b16 %v214
    %v322 = vunpack.c.h.b16 %v214
    %v323 = vunpack.c.l.b16 %v215
    %v324 = vunpack.c.h.b16 %v215
    %v325 = vunpack.c.l.b16 %v216
    %v326 = vunpack.c.h.b16 %v216
    %v327 = vpack.c.b16 %v265, %v263
    %v328 = vpack.c.b16 %v266, %v264
    %v329 = vpack.c.b16 %v269, %v267
    %v330 = vpack.c.b16 %v270, %v268
    %v331 = vpack.c.b16 %v273, %v271
    %v332 = vpack.c.b16 %v274, %v272
    %v333 = vpack.c.b16 %v277, %v275
    %v334 = vpack.c.b16 %v278, %v276
    %v335 = vpack.c.b16 %v281, %v279
    %v336 = vpack.c.b16 %v282, %v280
    %v337 = vpack.c.b16 %v285, %v283
    %v338 = vpack.c.b16 %v286, %v284
    %v339 = vpack.c.b16 %v289, %v287
    %v340 = vpack.c.b16 %v290, %v288
    %v341 = vpack.c.b16 %v293, %v291
    %v342 = vpack.c.b16 %v294, %v292
    %v343 = vpack.c.b16 %v297, %v295
    %v344 = vpack.c.b16 %v298, %v296
    %v345 = vpack.c.b16 %v301, %v299
    %v346 = vpack.c.b16 %v302, %v300
    %v347 = vpack.c.b16 %v305, %v303
    %v348 = vpack.c.b16 %v306, %v304
    %v349 = vpack.c.b16 %v309, %v307
    %v350 = vpack.c.b16 %v310, %v308
    %v351 = vpack.c.b16 %v313, %v311
    %v352 = vpack.c.b16 %v314, %v312
    %v353 = vpack.c.b16 %v317, %v315
    %v354 = vpack.c.b16 %v318, %v316
    %v355 = vpack.c.b16 %v321, %v319
    %v356 = vpack.c.b16 %v322, %v320
    %v357 = vpack.c.b16 %v325, %v323
    %v358 = vpack.c.b16 %v326, %v324
    %391 = vmatprep.subr.bf16.mxu0 %v328
    %392 = vmatpush1.bf16.msra.mxu0 %v327
    %393 = vmatprep.subr.bf16.mxu0 %v330
    %394 = vmatpush1.bf16.msra.mxu0 %v329
    %395 = vmatprep.subr.bf16.mxu0 %v332
    %396 = vmatpush1.bf16.msra.mxu0 %v331
    %397 = vmatprep.subr.bf16.mxu0 %v334
    %398 = vmatpush1.bf16.msra.mxu0 %v333
    %399 = vmatprep.subr.bf16.mxu0 %v336
    %400 = vmatpush1.bf16.msra.mxu0 %v335
    %401 = vmatprep.subr.bf16.mxu0 %v338
    %402 = vmatpush1.bf16.msra.mxu0 %v337
    %403 = vmatprep.subr.bf16.mxu0 %v340
    %404 = vmatpush1.bf16.msra.mxu0 %v339
    %405 = vmatprep.subr.bf16.mxu0 %v342
    %406 = vmatpush1.bf16.msra.mxu0 %v341
    %407 = vmatprep.subr.bf16.mxu0 %v344
    %408 = vmatpush1.bf16.msra.mxu0 %v343
    %409 = vmatprep.subr.bf16.mxu0 %v346
    %410 = vmatpush1.bf16.msra.mxu0 %v345
    %411 = vmatprep.subr.bf16.mxu0 %v348
    %412 = vmatpush1.bf16.msra.mxu0 %v347
    %413 = vmatprep.subr.bf16.mxu0 %v350
    %414 = vmatpush1.bf16.msra.mxu0 %v349
    %415 = vmatprep.subr.bf16.mxu0 %v352
    %416 = vmatpush1.bf16.msra.mxu0 %v351
    %417 = vmatprep.subr.bf16.mxu0 %v354
    %418 = vmatpush1.bf16.msra.mxu0 %v353
    %419 = vmatprep.subr.bf16.mxu0 %v356
    %420 = vmatpush1.bf16.msra.mxu0 %v355
    %421 = vmatprep.subr.bf16.mxu0 %v358
    %422 = vmatpush1.bf16.msra.mxu0 %v357
    %423 = vmatprep.mubr.bf16.mxu0 %v219
    %424 = vmatmul.mubr.bf16.gmra.mrb[0].mxu0 %v218
    %v425 = vpop.f32.mrb[0].mxu0
    %v426 = vadd.f32 %v224, %v425
    %v427 = vpop.f32.mrb[0].mxu0
    %v428 = vadd.f32 %v228, %v427
    %v429 = vpop.f32.mrb[0].mxu0
    %v430 = vpop.f32.mrb[0].mxu0
    %431 = vdwg.mxu0
    %v432 = vmax.f32 %v426, 0.0
    %v433 = vmax.f32 %v428, 0.0
    %v434 = vld [vmem:[#allocation8] sm:$0xff]
    %v435 = vld [vmem:[#allocation8 + $0x8] sm:$0xff]
    %v436 = vld [vmem:[#allocation8 + $0x10] sm:$0xff]
    %v437 = vld [vmem:[#allocation8 + $0x18] sm:$0xff]
    %v438 = vld [vmem:[#allocation8 + $0x20] sm:$0xff]
    %v439 = vld [vmem:[#allocation8 + $0x28] sm:$0xff]
    %v440 = vld [vmem:[#allocation8 + $0x30] sm:$0xff]
    %v441 = vld [vmem:[#allocation8 + $0x38] sm:$0xff]
    %v442 = vld [vmem:[#allocation8 + $0x40] sm:$0xff]
    %v443 = vld [vmem:[#allocation8 + $0x48] sm:$0xff]
    %v444 = vld [vmem:[#allocation8 + $0x50] sm:$0xff]
    %v445 = vld [vmem:[#allocation8 + $0x58] sm:$0xff]
    %v446 = vld [vmem:[#allocation8 + $0x60] sm:$0xff]
    %v447 = vld [vmem:[#allocation8 + $0x68] sm:$0xff]
    %v448 = vld [vmem:[#allocation8 + $0x70] sm:$0xff]
    %v449 = vld [vmem:[#allocation8 + $0x78] sm:$0xff]
    %v450 = vld [vmem:[#allocation8 + $0x80] sm:$0xff]
    %v451 = vld [vmem:[#allocation8 + $0x88] sm:$0xff]
    %v452 = vld [vmem:[#allocation8 + $0x90] sm:$0xff]
    %v453 = vld [vmem:[#allocation8 + $0x98] sm:$0xff]
    %v454 = vld [vmem:[#allocation8 + $0xa0] sm:$0xff]
    %v455 = vld [vmem:[#allocation8 + $0xa8] sm:$0xff]
    %v456 = vld [vmem:[#allocation8 + $0xb0] sm:$0xff]
    %v457 = vld [vmem:[#allocation8 + $0xb8] sm:$0xff]
    %v458 = vld [vmem:[#allocation8 + $0xc0] sm:$0xff]
    %v459 = vld [vmem:[#allocation8 + $0xc8] sm:$0xff]
    %v460 = vld [vmem:[#allocation8 + $0xd0] sm:$0xff]
    %v461 = vld [vmem:[#allocation8 + $0xd8] sm:$0xff]
    %v462 = vld [vmem:[#allocation8 + $0xe0] sm:$0xff]
    %v463 = vld [vmem:[#allocation8 + $0xe8] sm:$0xff]
    %v464 = vld [vmem:[#allocation8 + $0xf0] sm:$0xff]
    %v465 = vld [vmem:[#allocation8 + $0xf8] sm:$0xff]
    %v466 = vld [vmem:[%s6] sm:$0x3]
    %v467 = vpack.c.bf16 %v432, %v432
    %v468 = vpack.c.bf16 %v433, %v433
    %v470 = vlaneseq
    %v471 = vshrl.u32 %v470, 7
    %v472 = vsub.s32 0, %v471
    %v473 = vrot.slane %v466, %v472
    %v474 = vlaneseq
    %v475 = vshrl.u32 %v474, 7
    %v476 = vsub.s32 1, %v475
    %v477 = vrot.slane %v466, %v476
    %v512 = vunpack.c.l.b16 %v434
    %v513 = vunpack.c.h.b16 %v434
    %v514 = vunpack.c.l.b16 %v435
    %v515 = vunpack.c.h.b16 %v435
    %v516 = vunpack.c.l.b16 %v436
    %v517 = vunpack.c.h.b16 %v436
    %v518 = vunpack.c.l.b16 %v437
    %v519 = vunpack.c.h.b16 %v437
    %v520 = vunpack.c.l.b16 %v438
    %v521 = vunpack.c.h.b16 %v438
    %v522 = vunpack.c.l.b16 %v439
    %v523 = vunpack.c.h.b16 %v439
    %v524 = vunpack.c.l.b16 %v440
    %v525 = vunpack.c.h.b16 %v440
    %v526 = vunpack.c.l.b16 %v441
    %v527 = vunpack.c.h.b16 %v441
    %v528 = vunpack.c.l.b16 %v442
    %v529 = vunpack.c.h.b16 %v442
    %v530 = vunpack.c.l.b16 %v443
    %v531 = vunpack.c.h.b16 %v443
    %v532 = vunpack.c.l.b16 %v444
    %v533 = vunpack.c.h.b16 %v444
    %v534 = vunpack.c.l.b16 %v445
    %v535 = vunpack.c.h.b16 %v445
    %v536 = vunpack.c.l.b16 %v446
    %v537 = vunpack.c.h.b16 %v446
    %v538 = vunpack.c.l.b16 %v447
    %v539 = vunpack.c.h.b16 %v447
    %v540 = vunpack.c.l.b16 %v448
    %v541 = vunpack.c.h.b16 %v448
    %v542 = vunpack.c.l.b16 %v449
    %v543 = vunpack.c.h.b16 %v449
    %v544 = vunpack.c.l.b16 %v450
    %v545 = vunpack.c.h.b16 %v450
    %v546 = vunpack.c.l.b16 %v451
    %v547 = vunpack.c.h.b16 %v451
    %v548 = vunpack.c.l.b16 %v452
    %v549 = vunpack.c.h.b16 %v452
    %v550 = vunpack.c.l.b16 %v453
    %v551 = vunpack.c.h.b16 %v453
    %v552 = vunpack.c.l.b16 %v454
    %v553 = vunpack.c.h.b16 %v454
    %v554 = vunpack.c.l.b16 %v455
    %v555 = vunpack.c.h.b16 %v455
    %v556 = vunpack.c.l.b16 %v456
    %v557 = vunpack.c.h.b16 %v456
    %v558 = vunpack.c.l.b16 %v457
    %v559 = vunpack.c.h.b16 %v457
    %v560 = vunpack.c.l.b16 %v458
    %v561 = vunpack.c.h.b16 %v458
    %v562 = vunpack.c.l.b16 %v459
    %v563 = vunpack.c.h.b16 %v459
    %v564 = vunpack.c.l.b16 %v460
    %v565 = vunpack.c.h.b16 %v460
    %v566 = vunpack.c.l.b16 %v461
    %v567 = vunpack.c.h.b16 %v461
    %v568 = vunpack.c.l.b16 %v462
    %v569 = vunpack.c.h.b16 %v462
    %v570 = vunpack.c.l.b16 %v463
    %v571 = vunpack.c.h.b16 %v463
    %v572 = vunpack.c.l.b16 %v464
    %v573 = vunpack.c.h.b16 %v464
    %v574 = vunpack.c.l.b16 %v465
    %v575 = vunpack.c.h.b16 %v465
    %v576 = vpack.c.b16 %v514, %v512
    %v577 = vpack.c.b16 %v515, %v513
    %v578 = vpack.c.b16 %v518, %v516
    %v579 = vpack.c.b16 %v519, %v517
    %v580 = vpack.c.b16 %v522, %v520
    %v581 = vpack.c.b16 %v523, %v521
    %v582 = vpack.c.b16 %v526, %v524
    %v583 = vpack.c.b16 %v527, %v525
    %v584 = vpack.c.b16 %v530, %v528
    %v585 = vpack.c.b16 %v531, %v529
    %v586 = vpack.c.b16 %v534, %v532
    %v587 = vpack.c.b16 %v535, %v533
    %v588 = vpack.c.b16 %v538, %v536
    %v589 = vpack.c.b16 %v539, %v537
    %v590 = vpack.c.b16 %v542, %v540
    %v591 = vpack.c.b16 %v543, %v541
    %v592 = vpack.c.b16 %v546, %v544
    %v593 = vpack.c.b16 %v547, %v545
    %v594 = vpack.c.b16 %v550, %v548
    %v595 = vpack.c.b16 %v551, %v549
    %v596 = vpack.c.b16 %v554, %v552
    %v597 = vpack.c.b16 %v555, %v553
    %v598 = vpack.c.b16 %v558, %v556
    %v599 = vpack.c.b16 %v559, %v557
    %v600 = vpack.c.b16 %v562, %v560
    %v601 = vpack.c.b16 %v563, %v561
    %v602 = vpack.c.b16 %v566, %v564
    %v603 = vpack.c.b16 %v567, %v565
    %v604 = vpack.c.b16 %v570, %v568
    %v605 = vpack.c.b16 %v571, %v569
    %v606 = vpack.c.b16 %v574, %v572
    %v607 = vpack.c.b16 %v575, %v573
    %640 = vmatprep.subr.bf16.mxu0 %v577
    %641 = vmatpush1.bf16.msra.mxu0 %v576
    %642 = vmatprep.subr.bf16.mxu0 %v579
    %643 = vmatpush1.bf16.msra.mxu0 %v578
    %644 = vmatprep.subr.bf16.mxu0 %v581
    %645 = vmatpush1.bf16.msra.mxu0 %v580
    %646 = vmatprep.subr.bf16.mxu0 %v583
    %647 = vmatpush1.bf16.msra.mxu0 %v582
    %648 = vmatprep.subr.bf16.mxu0 %v585
    %649 = vmatpush1.bf16.msra.mxu0 %v584
    %650 = vmatprep.subr.bf16.mxu0 %v587
    %651 = vmatpush1.bf16.msra.mxu0 %v586
    %652 = vmatprep.subr.bf16.mxu0 %v589
    %653 = vmatpush1.bf16.msra.mxu0 %v588
    %654 = vmatprep.subr.bf16.mxu0 %v591
    %655 = vmatpush1.bf16.msra.mxu0 %v590
    %656 = vmatprep.subr.bf16.mxu0 %v593
    %657 = vmatpush1.bf16.msra.mxu0 %v592
    %658 = vmatprep.subr.bf16.mxu0 %v595
    %659 = vmatpush1.bf16.msra.mxu0 %v594
    %660 = vmatprep.subr.bf16.mxu0 %v597
    %661 = vmatpush1.bf16.msra.mxu0 %v596
    %662 = vmatprep.subr.bf16.mxu0 %v599
    %663 = vmatpush1.bf16.msra.mxu0 %v598
    %664 = vmatprep.subr.bf16.mxu0 %v601
    %665 = vmatpush1.bf16.msra.mxu0 %v600
    %666 = vmatprep.subr.bf16.mxu0 %v603
    %667 = vmatpush1.bf16.msra.mxu0 %v602
    %668 = vmatprep.subr.bf16.mxu0 %v605
    %669 = vmatpush1.bf16.msra.mxu0 %v604
    %670 = vmatprep.subr.bf16.mxu0 %v607
    %671 = vmatpush1.bf16.msra.mxu0 %v606
    %672 = vmatprep.mubr.bf16.mxu0 %v468
    %673 = vmatmul.mubr.bf16.gmra.mrb[0].mxu0 %v467
    %v674 = vpop.f32.mrb[0].mxu0
    %v675 = vadd.f32 %v473, %v674
    %v676 = vpop.f32.mrb[0].mxu0
    %v677 = vadd.f32 %v477, %v676
    %v678 = vpop.f32.mrb[0].mxu0
    %v679 = vpop.f32.mrb[0].mxu0
    %680 = vdwg.mxu0
    %v681 = vmax.f32 %v675, 0.0
    %v682 = vmax.f32 %v677, 0.0
    %v683 = vld [vmem:[#allocation10] sm:$0xf]
    %v684 = vld [vmem:[#allocation10 + $0x4] sm:$0xf]
    %v685 = vld [vmem:[#allocation10 + $0x8] sm:$0xf]
    %v686 = vld [vmem:[#allocation10 + $0xc] sm:$0xf]
    %v687 = vld [vmem:[#allocation10 + $0x10] sm:$0xf]
    %v688 = vld [vmem:[#allocation10 + $0x14] sm:$0xf]
    %v689 = vld [vmem:[#allocation10 + $0x18] sm:$0xf]
    %v690 = vld [vmem:[#allocation10 + $0x1c] sm:$0xf]
    %v691 = vld [vmem:[#allocation10 + $0x20] sm:$0xf]
    %v692 = vld [vmem:[#allocation10 + $0x24] sm:$0xf]
    %v693 = vld [vmem:[#allocation10 + $0x28] sm:$0xf]
    %v694 = vld [vmem:[#allocation10 + $0x2c] sm:$0xf]
    %v695 = vld [vmem:[#allocation10 + $0x30] sm:$0xf]
    %v696 = vld [vmem:[#allocation10 + $0x34] sm:$0xf]
    %v697 = vld [vmem:[#allocation10 + $0x38] sm:$0xf]
    %v698 = vld [vmem:[#allocation10 + $0x3c] sm:$0xf]
    %v699 = vld [vmem:[#allocation10 + $0x40] sm:$0xf]
    %v700 = vld [vmem:[#allocation10 + $0x44] sm:$0xf]
    %v701 = vld [vmem:[#allocation10 + $0x48] sm:$0xf]
    %v702 = vld [vmem:[#allocation10 + $0x4c] sm:$0xf]
    %v703 = vld [vmem:[#allocation10 + $0x50] sm:$0xf]
    %v704 = vld [vmem:[#allocation10 + $0x54] sm:$0xf]
    %v705 = vld [vmem:[#allocation10 + $0x58] sm:$0xf]
    %v706 = vld [vmem:[#allocation10 + $0x5c] sm:$0xf]
    %v707 = vld [vmem:[#allocation10 + $0x60] sm:$0xf]
    %v708 = vld [vmem:[#allocation10 + $0x64] sm:$0xf]
    %v709 = vld [vmem:[#allocation10 + $0x68] sm:$0xf]
    %v710 = vld [vmem:[#allocation10 + $0x6c] sm:$0xf]
    %v711 = vld [vmem:[#allocation10 + $0x70] sm:$0xf]
    %v712 = vld [vmem:[#allocation10 + $0x74] sm:$0xf]
    %v713 = vld [vmem:[#allocation10 + $0x78] sm:$0xf]
    %v714 = vld [vmem:[#allocation10 + $0x7c] sm:$0xf]
    %v715 = vld [vmem:[%s8] sm:$0x1]
    %v716 = vpack.c.bf16 %v681, %v681
    %v717 = vpack.c.bf16 %v682, %v682
    %v719 = vlaneseq
    %v720 = vshrl.u32 %v719, 7
    %v721 = vsub.s32 0, %v720
    %v722 = vrot.slane %v715, %v721
    %v756 = vunpack.c.l.b16 %v683
    %v757 = vunpack.c.l.b16 %v684
    %v758 = vunpack.c.l.b16 %v685
    %v759 = vunpack.c.l.b16 %v686
    %v760 = vunpack.c.l.b16 %v687
    %v761 = vunpack.c.l.b16 %v688
    %v762 = vunpack.c.l.b16 %v689
    %v763 = vunpack.c.l.b16 %v690
    %v764 = vunpack.c.l.b16 %v691
    %v765 = vunpack.c.l.b16 %v692
    %v766 = vunpack.c.l.b16 %v693
    %v767 = vunpack.c.l.b16 %v694
    %v768 = vunpack.c.l.b16 %v695
    %v769 = vunpack.c.l.b16 %v696
    %v770 = vunpack.c.l.b16 %v697
    %v771 = vunpack.c.l.b16 %v698
    %v772 = vunpack.c.l.b16 %v699
    %v773 = vunpack.c.l.b16 %v700
    %v774 = vunpack.c.l.b16 %v701
    %v775 = vunpack.c.l.b16 %v702
    %v776 = vunpack.c.l.b16 %v703
    %v777 = vunpack.c.l.b16 %v704
    %v778 = vunpack.c.l.b16 %v705
    %v779 = vunpack.c.l.b16 %v706
    %v780 = vunpack.c.l.b16 %v707
    %v781 = vunpack.c.l.b16 %v708
    %v782 = vunpack.c.l.b16 %v709
    %v783 = vunpack.c.l.b16 %v710
    %v784 = vunpack.c.l.b16 %v711
    %v785 = vunpack.c.l.b16 %v712
    %v786 = vunpack.c.l.b16 %v713
    %v787 = vunpack.c.l.b16 %v714
    %v788 = vpack.c.b16 %v757, %v756
    %v789 = vpack.c.b16 %v759, %v758
    %v790 = vpack.c.b16 %v761, %v760
    %v791 = vpack.c.b16 %v763, %v762
    %v792 = vpack.c.b16 %v765, %v764
    %v793 = vpack.c.b16 %v767, %v766
    %v794 = vpack.c.b16 %v769, %v768
    %v795 = vpack.c.b16 %v771, %v770
    %v796 = vpack.c.b16 %v773, %v772
    %v797 = vpack.c.b16 %v775, %v774
    %v798 = vpack.c.b16 %v777, %v776
    %v799 = vpack.c.b16 %v779, %v778
    %v800 = vpack.c.b16 %v781, %v780
    %v801 = vpack.c.b16 %v783, %v782
    %v802 = vpack.c.b16 %v785, %v784
    %v803 = vpack.c.b16 %v787, %v786
    %820 = vmatprep.subr.bf16.mxu0 0
    %821 = vmatpush1.bf16.msra.mxu0 %v788
    %822 = vmatprep.subr.bf16.mxu0 0
    %823 = vmatpush1.bf16.msra.mxu0 %v789
    %824 = vmatprep.subr.bf16.mxu0 0
    %825 = vmatpush1.bf16.msra.mxu0 %v790
    %826 = vmatprep.subr.bf16.mxu0 0
    %827 = vmatpush1.bf16.msra.mxu0 %v791
    %828 = vmatprep.subr.bf16.mxu0 0
    %829 = vmatpush1.bf16.msra.mxu0 %v792
    %830 = vmatprep.subr.bf16.mxu0 0
    %831 = vmatpush1.bf16.msra.mxu0 %v793
    %832 = vmatprep.subr.bf16.mxu0 0
    %833 = vmatpush1.bf16.msra.mxu0 %v794
    %834 = vmatprep.subr.bf16.mxu0 0
    %835 = vmatpush1.bf16.msra.mxu0 %v795
    %836 = vmatprep.subr.bf16.mxu0 0
    %837 = vmatpush1.bf16.msra.mxu0 %v796
    %838 = vmatprep.subr.bf16.mxu0 0
    %839 = vmatpush1.bf16.msra.mxu0 %v797
    %840 = vmatprep.subr.bf16.mxu0 0
    %841 = vmatpush1.bf16.msra.mxu0 %v798
    %842 = vmatprep.subr.bf16.mxu0 0
    %843 = vmatpush1.bf16.msra.mxu0 %v799
    %844 = vmatprep.subr.bf16.mxu0 0
    %845 = vmatpush1.bf16.msra.mxu0 %v800
    %846 = vmatprep.subr.bf16.mxu0 0
    %847 = vmatpush1.bf16.msra.mxu0 %v801
    %848 = vmatprep.subr.bf16.mxu0 0
    %849 = vmatpush1.bf16.msra.mxu0 %v802
    %850 = vmatprep.subr.bf16.mxu0 0
    %851 = vmatpush1.bf16.msra.mxu0 %v803
    %852 = vmatprep.mubr.bf16.mxu0 %v717
    %853 = vmatmul.mubr.bf16.gmra.mrb[0].mxu0 %v716
    %v854 = vpop.f32.mrb[0].mxu0
    %v855 = vadd.f32 %v722, %v854
    %v856 = vpop.f32.mrb[0].mxu0
    %v857 = vpop.f32.mrb[0].mxu0
    %v858 = vpop.f32.mrb[0].mxu0
    %859 = vdwg.mxu0
    %v860 = vmax.f32 %v855, 0.0
    %861 = vst [vmem:[#allocation11] sm:$0xff] %v860
    // Predicated region
    $region58: #{tpu_custom_call.1} parent=1 // pred_check
      _
    $region59: #{tpu_custom_call.1} parent=1 // pred_check_branch
      %863 = sbr.rel (0) target = $region61
    $region60: #{tpu_custom_call.1} parent=1 // pred_region
      %s865 = ssub.s32 128, 128
      %866 = vsyncadd [#allocation4], %s865
      %s868 = sshll.u32 [#allocation11], 4
      %s869 = int_to_ptr.vmem [resolvable:$true] %s868
      %871 = dma.vmem_to_hbm [thread:$0]  %s869, 128, %s9, [#allocation4]
    $region61: #{tpu_custom_call.1} parent=1 // pred_fallthru
      _
    // Predicated region
    $region62: #{tpu_custom_call.1} parent=1 // pred_check
      _
    $region63: #{tpu_custom_call.1} parent=1 // pred_check_branch
      %873 = sbr.rel (0) target = $region65
    $region64: #{tpu_custom_call.1} parent=1 // pred_region
      %874 = dma.done [#allocation4], 128
    $region65: #{tpu_custom_call.1} parent=1 // pred_fallthru
      _
    %875 = vsyncpa [#allocation3], 1
    %876 = vsyncpa [#allocation6], 1
    %877 = vsyncpa [#allocation9], 1
    %878 = vsyncpa [#allocation4], 1

</llo_original>
